<compile_context>
chip_gen: v6e
topology: v6e:2x2x1
jax: 0.10.0
libtpu: 0.0.40
codegen_flags: <defaults>
</compile_context>

<pallas_src>
import functools

import jax
import jax.numpy as jnp
from jax.experimental import pallas as pl
from jax.experimental.pallas import tpu as pltpu

NUM_FTR = 300
LAYER_DIMS = [5, 16, 32, 64, 128, NUM_FTR]   # nn.Linear(5,16) ... Linear(128,300)

# Lane/sublane-friendly padded dims used inside the kernel.
PAD_IN = 8        # 5 -> 8   (sublane-aligned LHS of the first matmul)
PAD_HIDDEN = 128  # 16/32/64/128 -> 128 (one full 128-lane vreg / MXU tile)


def _round_up(x, m):
    return (x + m - 1) // m * m


def _cdiv(a, b):
    return -(-a // b)


def mlp_kernel(x_ref,
               w1_ref, b1_ref,
               w2_ref, b2_ref,
               w3_ref, b3_ref,
               w4_ref, b4_ref,
               w5_ref, b5_ref,
               o_ref):
    """Full forward pass of NNRegressor_MisesLnV for one batch tile."""

    def sigmoid(z):
        # Exact sigmoid via a single EUP tanh (cheaper than exp + divide).
        return 0.5 * jnp.tanh(0.5 * z) + 0.5

    def dense(h, w_ref, b_ref):
        # bf16 operands (native MXU path on v6e/v7x), f32 accumulation + bias.
        return jnp.dot(h.astype(jnp.bfloat16), w_ref[...],
                       preferred_element_type=jnp.float32) + b_ref[...]

    h = x_ref[...]                                  # (TB, 8) f32
    h = sigmoid(dense(h, w1_ref, b1_ref))           # (TB, 128)
    h = sigmoid(dense(h, w2_ref, b2_ref))
    h = sigmoid(dense(h, w3_ref, b3_ref))
    h = sigmoid(dense(h, w4_ref, b4_ref))
    o_ref[...] = dense(h, w5_ref, b5_ref).astype(o_ref.dtype)   # (TB, 300)


def _pad_params(params):
    """Zero-pad weights/biases to kernel dims; cast weights to bf16 once.

    Padded activation lanes become sigmoid(0)=0.5 but only ever multiply
    zero-padded weight rows in the next layer, so real outputs are unchanged.
    The final layer keeps its true output width (300).
    """
    dims = list(zip(LAYER_DIMS[:-1], LAYER_DIMS[1:]))
    padded = []
    for idx, ((din, dout), (w, b)) in enumerate(zip(dims, params)):
        pin = PAD_IN if idx == 0 else PAD_HIDDEN
        pout = NUM_FTR if idx == len(dims) - 1 else PAD_HIDDEN
        w = jnp.asarray(w, jnp.float32).reshape(din, dout)
        b = jnp.asarray(b, jnp.float32).reshape(1, dout)
        wp = jnp.zeros((pin, pout), jnp.float32).at[:din, :dout].set(w)
        bp = jnp.zeros((1, pout), jnp.float32).at[:, :dout].set(b)
        padded.append((wp.astype(jnp.bfloat16), bp))   # weights bf16, bias f32
    return padded


@functools.partial(jax.jit, static_argnames=("tb",))
def nn_regressor_mises_lnv(x, params, *, tb=2048):
    """params = [(W1,b1), ..., (W5,b5)] with W_i (in,out), b_i (out,) or (1,out)."""
    B, F = x.shape
    assert F == LAYER_DIMS[0]

    # ---- tile-size selection: minimize batch padding, keep MXU-friendly tiles
    if B <= tb:
        # Small batch: one exact block (block == full dim -> no padding at all).
        # For batches big enough to matter, keep >=2 blocks so v7x can shard
        # the 'parallel' grid axis across both TensorCores.
        nb = 1 if B <= 1024 else 2
    else:
        nb = max(2, _cdiv(B, tb))
    if nb == 1:
        tb_eff = B
    else:
        tb_eff = _round_up(_cdiv(B, nb), 8)
    padded_b = nb * tb_eff          # padding < 8*nb rows (was up to ~tb before)

    # ---- pad input features 5 -> 8 (and batch, if any padding is needed)
    x_pad = jnp.zeros((padded_b, PAD_IN), jnp.float32).at[:B, :F].set(x)

    padded_params = _pad_params(params)
    flat_params = []
    for w, b in padded_params:
        flat_params.extend([w, b])

    # x tiled over batch; every weight/bias is one full-array block with a
    # constant index map so it stays resident in VMEM across all grid steps
    # (Pallas skips the re-DMA when the block index does not change).
    in_specs = [pl.BlockSpec((tb_eff, PAD_IN), lambda i: (i, 0))]
    for w, b in padded_params:
        in_specs.append(pl.BlockSpec(w.shape, lambda i: (0, 0)))
        in_specs.append(pl.BlockSpec(b.shape, lambda i: (0, 0)))
    # Output block last dim == full array dim (300): no wrapper-side lane slice.
    out_spec = pl.BlockSpec((tb_eff, NUM_FTR), lambda i: (i, 0))

    # Cost estimate in PADDED dims (consistent advisory hint).
    pdims = ([(PAD_IN, PAD_HIDDEN)]
             + [(PAD_HIDDEN, PAD_HIDDEN)] * 3
             + [(PAD_HIDDEN, NUM_FTR)])
    flops = 2 * padded_b * sum(a * b for a, b in pdims)
    transcendentals = padded_b * 4 * PAD_HIDDEN
    bytes_accessed = (4 * padded_b * (PAD_IN + NUM_FTR)
                      + sum(2 * w.size + 4 * b.size for w, b in padded_params))

    out = pl.pallas_call(
        mlp_kernel,
        out_shape=jax.ShapeDtypeStruct((padded_b, NUM_FTR), jnp.float32),
        grid_spec=pltpu.PrefetchScalarGridSpec(
            num_scalar_prefetch=0,
            grid=(nb,),
            in_specs=in_specs,
            out_specs=out_spec,
        ),
        compiler_params=pltpu.CompilerParams(
            dimension_semantics=("parallel",),
            # Large tiles overflow v5e's 16 MiB default scoped-VMEM limit;
            # 48 MiB is safely below every generation's physical VMEM.
            vmem_limit_bytes=48 * 1024 * 1024,
        ),
        cost_estimate=pl.CostEstimate(
            flops=flops,
            transcendentals=transcendentals,
            bytes_accessed=bytes_accessed),
    )(x_pad, *flat_params)

    if padded_b != B:
        out = out[:B]
    return out


def init_params(key):
    """Deterministic synthetic init matching the PyTorch module's shapes.

    PyTorch nn.Linear(in,out) has weight (out,in), bias (out,).  Generated in
    that convention, then transposed to (in,out) / reshaped to (1,out)."""
    params = []
    for din, dout in zip(LAYER_DIMS[:-1], LAYER_DIMS[1:]):
        kw, kb, key = jax.random.split(key, 3)
        bound = 1.0 / (din ** 0.5)  # PyTorch's default uniform bound
        w_torch = jax.random.uniform(kw, (dout, din), jnp.float32, -bound, bound)
        b_torch = jax.random.uniform(kb, (dout,), jnp.float32, -bound, bound)
        params.append((w_torch.T, b_torch.reshape(1, dout)))
    return params


def reference_forward(x, params):
    """Pure-JAX (f32) reference of the PyTorch forward pass."""
    h = x
    for i, (w, b) in enumerate(params):
        h = h @ w + b
        if i < len(params) - 1:
            h = jax.nn.sigmoid(h)
    return h


if __name__ == "__main__":
    key = jax.random.PRNGKey(0)
    kx, kp = jax.random.split(key)
    params = init_params(kp)

    # Tolerance reflects bf16 matmul operands (f32 accumulation) vs f32 reference.
    ATOL = RTOL = 5e-2

    # Small batch: single exact block, no padding, no slice.
    B = 16
    x = jax.random.normal(kx, (B, 5), jnp.float32)
    out = jax.block_until_ready(nn_regressor_mises_lnv(x, params))
    ref = reference_forward(x, params)
    assert out.shape == (B, NUM_FTR)
    assert jnp.allclose(out, ref, atol=ATOL, rtol=RTOL), "mismatch vs reference"

    # Odd batch (B % 8 != 0): still a single exact block, zero padding.
    x2 = jax.random.normal(jax.random.fold_in(kx, 1), (13, 5), jnp.float32)
    out2 = jax.block_until_ready(nn_regressor_mises_lnv(x2, params))
    assert out2.shape == (13, NUM_FTR)
    assert jnp.allclose(out2, reference_forward(x2, params), atol=ATOL, rtol=RTOL)

    # Multi-block path with minimal batch padding (tiny tb to force grid > 1).
    x3 = jax.random.normal(jax.random.fold_in(kx, 2), (40, 5), jnp.float32)
    out3 = jax.block_until_ready(nn_regressor_mises_lnv(x3, params, tb=16))
    assert out3.shape == (40, NUM_FTR)
    assert jnp.allclose(out3, reference_forward(x3, params), atol=ATOL, rtol=RTOL)

    print("KERNEL_OK")
</pallas_src>

<mosaic_0001>
module attributes {stable_mosaic.version = 11 : i64} {
  func.func @mlp_kernel(%arg0: i32, %arg1: memref<16x8xf32, #tpu.memory_space<vmem>>, %arg2: memref<8x128xbf16, #tpu.memory_space<vmem>>, %arg3: memref<1x128xf32, #tpu.memory_space<vmem>>, %arg4: memref<128x128xbf16, #tpu.memory_space<vmem>>, %arg5: memref<1x128xf32, #tpu.memory_space<vmem>>, %arg6: memref<128x128xbf16, #tpu.memory_space<vmem>>, %arg7: memref<1x128xf32, #tpu.memory_space<vmem>>, %arg8: memref<128x128xbf16, #tpu.memory_space<vmem>>, %arg9: memref<1x128xf32, #tpu.memory_space<vmem>>, %arg10: memref<128x300xbf16, #tpu.memory_space<vmem>>, %arg11: memref<1x300xf32, #tpu.memory_space<vmem>>, %arg12: memref<16x300xf32, #tpu.memory_space<vmem>>) attributes {dimension_semantics = [#tpu.dimension_semantics<parallel>], iteration_bounds = array<i64: 1>, scalar_prefetch = 0 : i64, scratch_operands = 0 : i64, tpu.core_type = #tpu.core_type<tc>, window_params = [{transform_indices = @transform_0, window_bounds = array<i64: 16, 8>}, {pipeline_mode = #tpu.pipeline_mode<synchronous>, transform_indices = @transform_1, window_bounds = array<i64: 8, 128>}, {pipeline_mode = #tpu.pipeline_mode<synchronous>, transform_indices = @transform_2, window_bounds = array<i64: 1, 128>}, {pipeline_mode = #tpu.pipeline_mode<synchronous>, transform_indices = @transform_3, window_bounds = array<i64: 128, 128>}, {pipeline_mode = #tpu.pipeline_mode<synchronous>, transform_indices = @transform_4, window_bounds = array<i64: 1, 128>}, {pipeline_mode = #tpu.pipeline_mode<synchronous>, transform_indices = @transform_5, window_bounds = array<i64: 128, 128>}, {pipeline_mode = #tpu.pipeline_mode<synchronous>, transform_indices = @transform_6, window_bounds = array<i64: 1, 128>}, {pipeline_mode = #tpu.pipeline_mode<synchronous>, transform_indices = @transform_7, window_bounds = array<i64: 128, 128>}, {pipeline_mode = #tpu.pipeline_mode<synchronous>, transform_indices = @transform_8, window_bounds = array<i64: 1, 128>}, {pipeline_mode = #tpu.pipeline_mode<synchronous>, transform_indices = @transform_9, window_bounds = array<i64: 128, 300>}, {pipeline_mode = #tpu.pipeline_mode<synchronous>, transform_indices = @transform_10, window_bounds = array<i64: 1, 300>}, {transform_indices = @transform_11, window_bounds = array<i64: 16, 300>}]} {
    %c0 = arith.constant 0 : index
    %c0_0 = arith.constant 0 : index
    %0 = vector.load %arg1[%c0, %c0_0] : memref<16x8xf32, #tpu.memory_space<vmem>>, vector<16x8xf32>
    %1 = arith.truncf %0 : vector<16x8xf32> to vector<16x8xbf16>
    %c0_1 = arith.constant 0 : index
    %c0_2 = arith.constant 0 : index
    %2 = vector.load %arg2[%c0_1, %c0_2] : memref<8x128xbf16, #tpu.memory_space<vmem>>, vector<8x128xbf16>
    %cst = arith.constant dense<0.000000e+00> : vector<16x128xf32>
    %3 = tpu.matmul %1, %2, %cst {dimension_numbers = #tpu.dot_dimension_numbers<[1], [0], [0], [1], [0, 0, 1, 1], [], []>} : vector<16x8xbf16>, vector<8x128xbf16>, vector<16x128xf32> -> vector<16x128xf32>
    %c0_3 = arith.constant 0 : index
    %c0_4 = arith.constant 0 : index
    %4 = vector.load %arg3[%c0_3, %c0_4] : memref<1x128xf32, #tpu.memory_space<vmem>>, vector<1x128xf32>
    %5 = vector.broadcast %4 : vector<1x128xf32> to vector<16x128xf32>
    %6 = arith.addf %3, %5 : vector<16x128xf32>
    %cst_5 = arith.constant 5.000000e-01 : f32
    %7 = vector.broadcast %cst_5 : f32 to vector<16x128xf32>
    %8 = arith.mulf %7, %6 : vector<16x128xf32>
    %9 = math.tanh %8 : vector<16x128xf32>
    %cst_6 = arith.constant 5.000000e-01 : f32
    %10 = vector.broadcast %cst_6 : f32 to vector<16x128xf32>
    %11 = arith.mulf %10, %9 : vector<16x128xf32>
    %cst_7 = arith.constant 5.000000e-01 : f32
    %12 = vector.broadcast %cst_7 : f32 to vector<16x128xf32>
    %13 = arith.addf %11, %12 : vector<16x128xf32>
    %14 = arith.truncf %13 : vector<16x128xf32> to vector<16x128xbf16>
    %c0_8 = arith.constant 0 : index
    %c0_9 = arith.constant 0 : index
    %15 = vector.load %arg4[%c0_8, %c0_9] : memref<128x128xbf16, #tpu.memory_space<vmem>>, vector<128x128xbf16>
    %cst_10 = arith.constant dense<0.000000e+00> : vector<16x128xf32>
    %16 = tpu.matmul %14, %15, %cst_10 {dimension_numbers = #tpu.dot_dimension_numbers<[1], [0], [0], [1], [0, 0, 1, 1], [], []>} : vector<16x128xbf16>, vector<128x128xbf16>, vector<16x128xf32> -> vector<16x128xf32>
    %c0_11 = arith.constant 0 : index
    %c0_12 = arith.constant 0 : index
    %17 = vector.load %arg5[%c0_11, %c0_12] : memref<1x128xf32, #tpu.memory_space<vmem>>, vector<1x128xf32>
    %18 = vector.broadcast %17 : vector<1x128xf32> to vector<16x128xf32>
    %19 = arith.addf %16, %18 : vector<16x128xf32>
    %cst_13 = arith.constant 5.000000e-01 : f32
    %20 = vector.broadcast %cst_13 : f32 to vector<16x128xf32>
    %21 = arith.mulf %20, %19 : vector<16x128xf32>
    %22 = math.tanh %21 : vector<16x128xf32>
    %cst_14 = arith.constant 5.000000e-01 : f32
    %23 = vector.broadcast %cst_14 : f32 to vector<16x128xf32>
    %24 = arith.mulf %23, %22 : vector<16x128xf32>
    %cst_15 = arith.constant 5.000000e-01 : f32
    %25 = vector.broadcast %cst_15 : f32 to vector<16x128xf32>
    %26 = arith.addf %24, %25 : vector<16x128xf32>
    %27 = arith.truncf %26 : vector<16x128xf32> to vector<16x128xbf16>
    %c0_16 = arith.constant 0 : index
    %c0_17 = arith.constant 0 : index
    %28 = vector.load %arg6[%c0_16, %c0_17] : memref<128x128xbf16, #tpu.memory_space<vmem>>, vector<128x128xbf16>
    %cst_18 = arith.constant dense<0.000000e+00> : vector<16x128xf32>
    %29 = tpu.matmul %27, %28, %cst_18 {dimension_numbers = #tpu.dot_dimension_numbers<[1], [0], [0], [1], [0, 0, 1, 1], [], []>} : vector<16x128xbf16>, vector<128x128xbf16>, vector<16x128xf32> -> vector<16x128xf32>
    %c0_19 = arith.constant 0 : index
    %c0_20 = arith.constant 0 : index
    %30 = vector.load %arg7[%c0_19, %c0_20] : memref<1x128xf32, #tpu.memory_space<vmem>>, vector<1x128xf32>
    %31 = vector.broadcast %30 : vector<1x128xf32> to vector<16x128xf32>
    %32 = arith.addf %29, %31 : vector<16x128xf32>
    %cst_21 = arith.constant 5.000000e-01 : f32
    %33 = vector.broadcast %cst_21 : f32 to vector<16x128xf32>
    %34 = arith.mulf %33, %32 : vector<16x128xf32>
    %35 = math.tanh %34 : vector<16x128xf32>
    %cst_22 = arith.constant 5.000000e-01 : f32
    %36 = vector.broadcast %cst_22 : f32 to vector<16x128xf32>
    %37 = arith.mulf %36, %35 : vector<16x128xf32>
    %cst_23 = arith.constant 5.000000e-01 : f32
    %38 = vector.broadcast %cst_23 : f32 to vector<16x128xf32>
    %39 = arith.addf %37, %38 : vector<16x128xf32>
    %40 = arith.truncf %39 : vector<16x128xf32> to vector<16x128xbf16>
    %c0_24 = arith.constant 0 : index
    %c0_25 = arith.constant 0 : index
    %41 = vector.load %arg8[%c0_24, %c0_25] : memref<128x128xbf16, #tpu.memory_space<vmem>>, vector<128x128xbf16>
    %cst_26 = arith.constant dense<0.000000e+00> : vector<16x128xf32>
    %42 = tpu.matmul %40, %41, %cst_26 {dimension_numbers = #tpu.dot_dimension_numbers<[1], [0], [0], [1], [0, 0, 1, 1], [], []>} : vector<16x128xbf16>, vector<128x128xbf16>, vector<16x128xf32> -> vector<16x128xf32>
    %c0_27 = arith.constant 0 : index
    %c0_28 = arith.constant 0 : index
    %43 = vector.load %arg9[%c0_27, %c0_28] : memref<1x128xf32, #tpu.memory_space<vmem>>, vector<1x128xf32>
    %44 = vector.broadcast %43 : vector<1x128xf32> to vector<16x128xf32>
    %45 = arith.addf %42, %44 : vector<16x128xf32>
    %cst_29 = arith.constant 5.000000e-01 : f32
    %46 = vector.broadcast %cst_29 : f32 to vector<16x128xf32>
    %47 = arith.mulf %46, %45 : vector<16x128xf32>
    %48 = math.tanh %47 : vector<16x128xf32>
    %cst_30 = arith.constant 5.000000e-01 : f32
    %49 = vector.broadcast %cst_30 : f32 to vector<16x128xf32>
    %50 = arith.mulf %49, %48 : vector<16x128xf32>
    %cst_31 = arith.constant 5.000000e-01 : f32
    %51 = vector.broadcast %cst_31 : f32 to vector<16x128xf32>
    %52 = arith.addf %50, %51 : vector<16x128xf32>
    %53 = arith.truncf %52 : vector<16x128xf32> to vector<16x128xbf16>
    %c0_32 = arith.constant 0 : index
    %c0_33 = arith.constant 0 : index
    %54 = vector.load %arg10[%c0_32, %c0_33] : memref<128x300xbf16, #tpu.memory_space<vmem>>, vector<128x300xbf16>
    %cst_34 = arith.constant dense<0.000000e+00> : vector<16x300xf32>
    %55 = tpu.matmul %53, %54, %cst_34 {dimension_numbers = #tpu.dot_dimension_numbers<[1], [0], [0], [1], [0, 0, 1, 1], [], []>} : vector<16x128xbf16>, vector<128x300xbf16>, vector<16x300xf32> -> vector<16x300xf32>
    %c0_35 = arith.constant 0 : index
    %c0_36 = arith.constant 0 : index
    %56 = vector.load %arg11[%c0_35, %c0_36] : memref<1x300xf32, #tpu.memory_space<vmem>>, vector<1x300xf32>
    %57 = vector.broadcast %56 : vector<1x300xf32> to vector<16x300xf32>
    %58 = arith.addf %55, %57 : vector<16x300xf32>
    %c0_37 = arith.constant 0 : index
    %c0_38 = arith.constant 0 : index
    %59 = vector.load %arg12[%c0_37, %c0_38] : memref<16x300xf32, #tpu.memory_space<vmem>>, vector<16x300xf32>
    tpu.vector_store %arg12[%c0_37, %c0_38], %58 {strides = array<i32>} : memref<16x300xf32, #tpu.memory_space<vmem>>, vector<16x300xf32>,
    return
  }
  func.func @transform_0(%arg0: i32) -> (i32, i32) {
    %c0_i32 = arith.constant 0 : i32
    %c0_i32_0 = arith.constant 0 : i32
    return %arg0, %c0_i32 : i32, i32
  }
  func.func @transform_1(%arg0: i32) -> (i32, i32) {
    %c0_i32 = arith.constant 0 : i32
    %c0_i32_0 = arith.constant 0 : i32
    %c0_i32_1 = arith.constant 0 : i32
    return %c0_i32, %c0_i32_0 : i32, i32
  }
  func.func @transform_2(%arg0: i32) -> (i32, i32) {
    %c0_i32 = arith.constant 0 : i32
    %c0_i32_0 = arith.constant 0 : i32
    %c0_i32_1 = arith.constant 0 : i32
    return %c0_i32, %c0_i32_0 : i32, i32
  }
  func.func @transform_3(%arg0: i32) -> (i32, i32) {
    %c0_i32 = arith.constant 0 : i32
    %c0_i32_0 = arith.constant 0 : i32
    %c0_i32_1 = arith.constant 0 : i32
    return %c0_i32, %c0_i32_0 : i32, i32
  }
  func.func @transform_4(%arg0: i32) -> (i32, i32) {
    %c0_i32 = arith.constant 0 : i32
    %c0_i32_0 = arith.constant 0 : i32
    %c0_i32_1 = arith.constant 0 : i32
    return %c0_i32, %c0_i32_0 : i32, i32
  }
  func.func @transform_5(%arg0: i32) -> (i32, i32) {
    %c0_i32 = arith.constant 0 : i32
    %c0_i32_0 = arith.constant 0 : i32
    %c0_i32_1 = arith.constant 0 : i32
    return %c0_i32, %c0_i32_0 : i32, i32
  }
  func.func @transform_6(%arg0: i32) -> (i32, i32) {
    %c0_i32 = arith.constant 0 : i32
    %c0_i32_0 = arith.constant 0 : i32
    %c0_i32_1 = arith.constant 0 : i32
    return %c0_i32, %c0_i32_0 : i32, i32
  }
  func.func @transform_7(%arg0: i32) -> (i32, i32) {
    %c0_i32 = arith.constant 0 : i32
    %c0_i32_0 = arith.constant 0 : i32
    %c0_i32_1 = arith.constant 0 : i32
    return %c0_i32, %c0_i32_0 : i32, i32
  }
  func.func @transform_8(%arg0: i32) -> (i32, i32) {
    %c0_i32 = arith.constant 0 : i32
    %c0_i32_0 = arith.constant 0 : i32
    %c0_i32_1 = arith.constant 0 : i32
    return %c0_i32, %c0_i32_0 : i32, i32
  }
  func.func @transform_9(%arg0: i32) -> (i32, i32) {
    %c0_i32 = arith.constant 0 : i32
    %c0_i32_0 = arith.constant 0 : i32
    %c0_i32_1 = arith.constant 0 : i32
    return %c0_i32, %c0_i32_0 : i32, i32
  }
  func.func @transform_10(%arg0: i32) -> (i32, i32) {
    %c0_i32 = arith.constant 0 : i32
    %c0_i32_0 = arith.constant 0 : i32
    %c0_i32_1 = arith.constant 0 : i32
    return %c0_i32, %c0_i32_0 : i32, i32
  }
  func.func @transform_11(%arg0: i32) -> (i32, i32) {
    %c0_i32 = arith.constant 0 : i32
    %c0_i32_0 = arith.constant 0 : i32
    return %arg0, %c0_i32 : i32, i32
  }
}

</mosaic_0001>

<llo_original>
// kernel: nn_regressor_mises_lnv.1
$region0: #{nn_regressor_mises_lnv.1}
  #allocation0 [shape = 'u32[]', space=smem, size = 0x4, offset = 0x4, fixed_abs, tag = 'smem constant byte address 0x4 - core index']
  #allocation1 [shape = 'u32[144,128]{1,0:T(1,128)}', space=vmem, size = 0x12000, scoped, tag = 'internal scratch']
  %s0 = inlined_call_operand.vmem [shape: f32[16,8], index: 0, kind: input, shape index: {}]
  %s1 = inlined_call_operand.vmem [shape: bf16[8,128], index: 1, kind: input, shape index: {}]
  %s2 = inlined_call_operand.vmem [shape: f32[1,128], index: 2, kind: input, shape index: {}]
  %s3 = inlined_call_operand.vmem [shape: bf16[128,128], index: 3, kind: input, shape index: {}]
  %s4 = inlined_call_operand.vmem [shape: f32[1,128], index: 4, kind: input, shape index: {}]
  %s5 = inlined_call_operand.vmem [shape: bf16[128,128], index: 5, kind: input, shape index: {}]
  %s6 = inlined_call_operand.vmem [shape: f32[1,128], index: 6, kind: input, shape index: {}]
  %s7 = inlined_call_operand.vmem [shape: bf16[128,128], index: 7, kind: input, shape index: {}]
  %s8 = inlined_call_operand.vmem [shape: f32[1,128], index: 8, kind: input, shape index: {}]
  %s9 = inlined_call_operand.vmem [shape: bf16[128,300], index: 9, kind: input, shape index: {}]
  %s10 = inlined_call_operand.vmem [shape: f32[1,300], index: 10, kind: input, shape index: {}]
  %s11 = inlined_call_operand.hbm [shape: f32[16,300], index: 11, kind: output, shape index: {}]
  %s12 = sld [smem:[#allocation0]]
  $region54: #{nn_regressor_mises_lnv.1} parent=0
    _
  %s14 = ssub.s32 1, %s12
  %s15 = scalar_select 0, %s14, %s12
  $region1: #{nn_regressor_mises_lnv.1} parent=0
    #allocation2 [shape = 'u8[24576]{0}', space=vmem, size = 0x6000, scoped, tag = 'output window, operand 0, single buffered']
    #allocation3 [shape = 's32[1]{0}', space=sflag, size = 0x4, scoped, tag = 'scoped memory for nn_regressor_mises_lnv.1']
    %16 = vsyncpa [#allocation3], 0
    // Predicated region
    $region2: #{nn_regressor_mises_lnv.1} parent=1 // pred_check
      _
    $region3: #{nn_regressor_mises_lnv.1} parent=1 // pred_check_branch
      %18 = sbr.rel (0) target = $region5
    $region4: #{nn_regressor_mises_lnv.1} parent=1 // pred_region
      _
    $region5: #{nn_regressor_mises_lnv.1} parent=1 // pred_fallthru
      _
    // Predicated region
    $region6: #{nn_regressor_mises_lnv.1} parent=1 // pred_check
      _
    $region7: #{nn_regressor_mises_lnv.1} parent=1 // pred_check_branch
      %20 = sbr.rel (0) target = $region9
    $region8: #{nn_regressor_mises_lnv.1} parent=1 // pred_region
      _
    $region9: #{nn_regressor_mises_lnv.1} parent=1 // pred_fallthru
      _
    // Predicated region
    $region10: #{nn_regressor_mises_lnv.1} parent=1 // pred_check
      _
    $region11: #{nn_regressor_mises_lnv.1} parent=1 // pred_check_branch
      %22 = sbr.rel (0) target = $region13
    $region12: #{nn_regressor_mises_lnv.1} parent=1 // pred_region
      _
    $region13: #{nn_regressor_mises_lnv.1} parent=1 // pred_fallthru
      _
    // Predicated region
    $region14: #{nn_regressor_mises_lnv.1} parent=1 // pred_check
      _
    $region15: #{nn_regressor_mises_lnv.1} parent=1 // pred_check_branch
      %24 = sbr.rel (0) target = $region17
    $region16: #{nn_regressor_mises_lnv.1} parent=1 // pred_region
      _
    $region17: #{nn_regressor_mises_lnv.1} parent=1 // pred_fallthru
      _
    // Predicated region
    $region18: #{nn_regressor_mises_lnv.1} parent=1 // pred_check
      _
    $region19: #{nn_regressor_mises_lnv.1} parent=1 // pred_check_branch
      %26 = sbr.rel (0) target = $region21
    $region20: #{nn_regressor_mises_lnv.1} parent=1 // pred_region
      _
    $region21: #{nn_regressor_mises_lnv.1} parent=1 // pred_fallthru
      _
    // Predicated region
    $region22: #{nn_regressor_mises_lnv.1} parent=1 // pred_check
      _
    $region23: #{nn_regressor_mises_lnv.1} parent=1 // pred_check_branch
      %28 = sbr.rel (0) target = $region25
    $region24: #{nn_regressor_mises_lnv.1} parent=1 // pred_region
      _
    $region25: #{nn_regressor_mises_lnv.1} parent=1 // pred_fallthru
      _
    // Predicated region
    $region26: #{nn_regressor_mises_lnv.1} parent=1 // pred_check
      _
    $region27: #{nn_regressor_mises_lnv.1} parent=1 // pred_check_branch
      %30 = sbr.rel (0) target = $region29
    $region28: #{nn_regressor_mises_lnv.1} parent=1 // pred_region
      _
    $region29: #{nn_regressor_mises_lnv.1} parent=1 // pred_fallthru
      _
    // Predicated region
    $region30: #{nn_regressor_mises_lnv.1} parent=1 // pred_check
      _
    $region31: #{nn_regressor_mises_lnv.1} parent=1 // pred_check_branch
      %32 = sbr.rel (0) target = $region33
    $region32: #{nn_regressor_mises_lnv.1} parent=1 // pred_region
      _
    $region33: #{nn_regressor_mises_lnv.1} parent=1 // pred_fallthru
      _
    // Predicated region
    $region34: #{nn_regressor_mises_lnv.1} parent=1 // pred_check
      _
    $region35: #{nn_regressor_mises_lnv.1} parent=1 // pred_check_branch
      %34 = sbr.rel (0) target = $region37
    $region36: #{nn_regressor_mises_lnv.1} parent=1 // pred_region
      _
    $region37: #{nn_regressor_mises_lnv.1} parent=1 // pred_fallthru
      _
    // Predicated region
    $region38: #{nn_regressor_mises_lnv.1} parent=1 // pred_check
      _
    $region39: #{nn_regressor_mises_lnv.1} parent=1 // pred_check_branch
      %36 = sbr.rel (0) target = $region41
    $region40: #{nn_regressor_mises_lnv.1} parent=1 // pred_region
      _
    $region41: #{nn_regressor_mises_lnv.1} parent=1 // pred_fallthru
      _
    // Predicated region
    $region42: #{nn_regressor_mises_lnv.1} parent=1 // pred_check
      _
    $region43: #{nn_regressor_mises_lnv.1} parent=1 // pred_check_branch
      %38 = sbr.rel (0) target = $region45
    $region44: #{nn_regressor_mises_lnv.1} parent=1 // pred_region
      _
    $region45: #{nn_regressor_mises_lnv.1} parent=1 // pred_fallthru
      _
    %v40 = vld [vmem:[%s0] sm:$0xff]
    %v41 = vld [vmem:[%s0 + $0x8] sm:$0xff]
    %v42 = vpack.c.bf16 %v41, %v40
    %v43 = vld [vmem:[%s1] sm:$0xf]
    %v44 = vld [vmem:[%s2] sm:$0x1]
    %v46 = vlaneseq
    %v47 = vshrl.u32 %v46, 7
    %v48 = vsub.s32 0, %v47
    %v49 = vrot.slane %v44, %v48
    %vm51 = vcmask 64512
    %v53 = vsel %vm51, %v42, 0
    %vm55 = vcmask 1043456
    %v57 = vsel %vm55, %v43, 0
    %59 = vmatprep.subr.bf16.mxu0 0
    %60 = vmatpush1.bf16.msra.mxu0 0
    %61 = vmatprep.subr.bf16.mxu0 0
    %62 = vmatpush1.bf16.msra.mxu0 0
    %63 = vmatprep.subr.bf16.mxu0 0
    %64 = vmatpush1.bf16.msra.mxu0 0
    %65 = vmatprep.subr.bf16.mxu0 0
    %66 = vmatpush1.bf16.msra.mxu0 0
    %67 = vmatprep.subr.bf16.mxu0 0
    %68 = vmatpush1.bf16.msra.mxu0 0
    %69 = vmatprep.subr.bf16.mxu0 0
    %70 = vmatpush1.bf16.msra.mxu0 0
    %71 = vmatprep.subr.bf16.mxu0 0
    %72 = vmatpush1.bf16.msra.mxu0 0
    %73 = vmatprep.subr.bf16.mxu0 0
    %74 = vmatpush1.bf16.msra.mxu0 %v57
    %75 = vmatprep.subr.bf16.mxu0 0
    %76 = vmatpush2.bf16.msra.mxu0 0
    %77 = vmatprep.subr.bf16.mxu0 0
    %78 = vmatpush2.bf16.msra.mxu0 0
    %79 = vmatprep.subr.bf16.mxu0 0
    %80 = vmatpush2.bf16.msra.mxu0 0
    %81 = vmatprep.subr.bf16.mxu0 0
    %82 = vmatpush2.bf16.msra.mxu0 0
    %83 = vmatprep.subr.bf16.mxu0 0
    %84 = vmatpush2.bf16.msra.mxu0 0
    %85 = vmatprep.subr.bf16.mxu0 0
    %86 = vmatpush2.bf16.msra.mxu0 0
    %87 = vmatprep.subr.bf16.mxu0 0
    %88 = vmatpush2.bf16.msra.mxu0 0
    %89 = vmatprep.subr.bf16.mxu0 0
    %90 = vmatpush2.bf16.msra.mxu0 0
    %91 = vmatprep.mubr.bf16.mxu0 0
    %92 = vmatmul.mubr.bf16.gmra.mxu0 %v53
    %v93 = vpop.f32.mrf.mxu0
    %v94 = vadd.f32 %v49, %v93
    %v95 = vpop.f32.mrf.mxu0
    %v96 = vpop.f32.mrf.mxu0
    %v97 = vadd.f32 %v49, %v96
    %v98 = vpop.f32.mrf.mxu0
    %99 = vdwg.mxu0
    %v100 = vmul.f32 %v94, 0.5
    %v101 = vmul.f32 %v97, 0.5
    %v102 = vtanh.pop %v100
    %v103 = vtanh.pop %v101
    %v104 = vmul.f32 %v102, 0.5
    %v105 = vmul.f32 %v103, 0.5
    %v106 = vadd.f32 %v104, 0.5
    %v107 = vadd.f32 %v105, 0.5
    %v108 = vpack.c.bf16 %v107, %v106
    %v109 = vld [vmem:[%s3] sm:$0xf]
    %v110 = vld [vmem:[%s3 + $0x4] sm:$0xf]
    %v111 = vld [vmem:[%s3 + $0x8] sm:$0xf]
    %v112 = vld [vmem:[%s3 + $0xc] sm:$0xf]
    %v113 = vld [vmem:[%s3 + $0x10] sm:$0xf]
    %v114 = vld [vmem:[%s3 + $0x14] sm:$0xf]
    %v115 = vld [vmem:[%s3 + $0x18] sm:$0xf]
    %v116 = vld [vmem:[%s3 + $0x1c] sm:$0xf]
    %v117 = vld [vmem:[%s3 + $0x20] sm:$0xf]
    %v118 = vld [vmem:[%s3 + $0x24] sm:$0xf]
    %v119 = vld [vmem:[%s3 + $0x28] sm:$0xf]
    %v120 = vld [vmem:[%s3 + $0x2c] sm:$0xf]
    %v121 = vld [vmem:[%s3 + $0x30] sm:$0xf]
    %v122 = vld [vmem:[%s3 + $0x34] sm:$0xf]
    %v123 = vld [vmem:[%s3 + $0x38] sm:$0xf]
    %v124 = vld [vmem:[%s3 + $0x3c] sm:$0xf]
    %v125 = vld [vmem:[%s4] sm:$0x1]
    %v127 = vlaneseq
    %v128 = vshrl.u32 %v127, 7
    %v129 = vsub.s32 0, %v128
    %v130 = vrot.slane %v125, %v129
    %v148 = vunpack.c.l.b16 %v109
    %v149 = vunpack.c.l.b16 %v110
    %v150 = vunpack.c.l.b16 %v111
    %v151 = vunpack.c.l.b16 %v112
    %v152 = vunpack.c.l.b16 %v113
    %v153 = vunpack.c.l.b16 %v114
    %v154 = vunpack.c.l.b16 %v115
    %v155 = vunpack.c.l.b16 %v116
    %v156 = vunpack.c.l.b16 %v117
    %v157 = vunpack.c.l.b16 %v118
    %v158 = vunpack.c.l.b16 %v119
    %v159 = vunpack.c.l.b16 %v120
    %v160 = vunpack.c.l.b16 %v121
    %v161 = vunpack.c.l.b16 %v122
    %v162 = vunpack.c.l.b16 %v123
    %v163 = vunpack.c.l.b16 %v124
    %v164 = vpack.c.b16 %v149, %v148
    %v165 = vpack.c.b16 %v151, %v150
    %v166 = vpack.c.b16 %v153, %v152
    %v167 = vpack.c.b16 %v155, %v154
    %v168 = vpack.c.b16 %v157, %v156
    %v169 = vpack.c.b16 %v159, %v158
    %v170 = vpack.c.b16 %v161, %v160
    %v171 = vpack.c.b16 %v163, %v162
    %180 = vmatprep.subr.bf16.mxu0 0
    %181 = vmatpush1.bf16.msra.mxu0 %v171
    %182 = vmatprep.subr.bf16.mxu0 0
    %183 = vmatpush1.bf16.msra.mxu0 %v170
    %184 = vmatprep.subr.bf16.mxu0 0
    %185 = vmatpush1.bf16.msra.mxu0 %v169
    %186 = vmatprep.subr.bf16.mxu0 0
    %187 = vmatpush1.bf16.msra.mxu0 %v168
    %188 = vmatprep.subr.bf16.mxu0 0
    %189 = vmatpush1.bf16.msra.mxu0 %v167
    %190 = vmatprep.subr.bf16.mxu0 0
    %191 = vmatpush1.bf16.msra.mxu0 %v166
    %192 = vmatprep.subr.bf16.mxu0 0
    %193 = vmatpush1.bf16.msra.mxu0 %v165
    %194 = vmatprep.subr.bf16.mxu0 0
    %195 = vmatpush1.bf16.msra.mxu0 %v164
    %196 = vmatprep.subr.bf16.mxu0 0
    %197 = vmatpush2.bf16.msra.mxu0 0
    %198 = vmatprep.subr.bf16.mxu0 0
    %199 = vmatpush2.bf16.msra.mxu0 0
    %200 = vmatprep.subr.bf16.mxu0 0
    %201 = vmatpush2.bf16.msra.mxu0 0
    %202 = vmatprep.subr.bf16.mxu0 0
    %203 = vmatpush2.bf16.msra.mxu0 0
    %204 = vmatprep.subr.bf16.mxu0 0
    %205 = vmatpush2.bf16.msra.mxu0 0
    %206 = vmatprep.subr.bf16.mxu0 0
    %207 = vmatpush2.bf16.msra.mxu0 0
    %208 = vmatprep.subr.bf16.mxu0 0
    %209 = vmatpush2.bf16.msra.mxu0 0
    %210 = vmatprep.subr.bf16.mxu0 0
    %211 = vmatpush2.bf16.msra.mxu0 0
    %212 = vmatprep.mubr.bf16.mxu0 0
    %213 = vmatmul.mubr.bf16.gmra.mxu0 %v108
    %v214 = vpop.f32.mrf.mxu0
    %v215 = vadd.f32 %v130, %v214
    %v216 = vpop.f32.mrf.mxu0
    %v217 = vpop.f32.mrf.mxu0
    %v218 = vadd.f32 %v130, %v217
    %v219 = vpop.f32.mrf.mxu0
    %220 = vdwg.mxu0
    %v221 = vmul.f32 %v215, 0.5
    %v222 = vmul.f32 %v218, 0.5
    %v223 = vtanh.pop %v221
    %v224 = vtanh.pop %v222
    %v225 = vmul.f32 %v223, 0.5
    %v226 = vmul.f32 %v224, 0.5
    %v227 = vadd.f32 %v225, 0.5
    %v228 = vadd.f32 %v226, 0.5
    %v229 = vpack.c.bf16 %v228, %v227
    %v230 = vld [vmem:[%s5] sm:$0xf]
    %v231 = vld [vmem:[%s5 + $0x4] sm:$0xf]
    %v232 = vld [vmem:[%s5 + $0x8] sm:$0xf]
    %v233 = vld [vmem:[%s5 + $0xc] sm:$0xf]
    %v234 = vld [vmem:[%s5 + $0x10] sm:$0xf]
    %v235 = vld [vmem:[%s5 + $0x14] sm:$0xf]
    %v236 = vld [vmem:[%s5 + $0x18] sm:$0xf]
    %v237 = vld [vmem:[%s5 + $0x1c] sm:$0xf]
    %v238 = vld [vmem:[%s5 + $0x20] sm:$0xf]
    %v239 = vld [vmem:[%s5 + $0x24] sm:$0xf]
    %v240 = vld [vmem:[%s5 + $0x28] sm:$0xf]
    %v241 = vld [vmem:[%s5 + $0x2c] sm:$0xf]
    %v242 = vld [vmem:[%s5 + $0x30] sm:$0xf]
    %v243 = vld [vmem:[%s5 + $0x34] sm:$0xf]
    %v244 = vld [vmem:[%s5 + $0x38] sm:$0xf]
    %v245 = vld [vmem:[%s5 + $0x3c] sm:$0xf]
    %v246 = vld [vmem:[%s6] sm:$0x1]
    %v248 = vlaneseq
    %v249 = vshrl.u32 %v248, 7
    %v250 = vsub.s32 0, %v249
    %v251 = vrot.slane %v246, %v250
    %v269 = vunpack.c.l.b16 %v230
    %v270 = vunpack.c.l.b16 %v231
    %v271 = vunpack.c.l.b16 %v232
    %v272 = vunpack.c.l.b16 %v233
    %v273 = vunpack.c.l.b16 %v234
    %v274 = vunpack.c.l.b16 %v235
    %v275 = vunpack.c.l.b16 %v236
    %v276 = vunpack.c.l.b16 %v237
    %v277 = vunpack.c.l.b16 %v238
    %v278 = vunpack.c.l.b16 %v239
    %v279 = vunpack.c.l.b16 %v240
    %v280 = vunpack.c.l.b16 %v241
    %v281 = vunpack.c.l.b16 %v242
    %v282 = vunpack.c.l.b16 %v243
    %v283 = vunpack.c.l.b16 %v244
    %v284 = vunpack.c.l.b16 %v245
    %v285 = vpack.c.b16 %v270, %v269
    %v286 = vpack.c.b16 %v272, %v271
    %v287 = vpack.c.b16 %v274, %v273
    %v288 = vpack.c.b16 %v276, %v275
    %v289 = vpack.c.b16 %v278, %v277
    %v290 = vpack.c.b16 %v280, %v279
    %v291 = vpack.c.b16 %v282, %v281
    %v292 = vpack.c.b16 %v284, %v283
    %301 = vmatprep.subr.bf16.mxu0 0
    %302 = vmatpush1.bf16.msra.mxu0 %v292
    %303 = vmatprep.subr.bf16.mxu0 0
    %304 = vmatpush1.bf16.msra.mxu0 %v291
    %305 = vmatprep.subr.bf16.mxu0 0
    %306 = vmatpush1.bf16.msra.mxu0 %v290
    %307 = vmatprep.subr.bf16.mxu0 0
    %308 = vmatpush1.bf16.msra.mxu0 %v289
    %309 = vmatprep.subr.bf16.mxu0 0
    %310 = vmatpush1.bf16.msra.mxu0 %v288
    %311 = vmatprep.subr.bf16.mxu0 0
    %312 = vmatpush1.bf16.msra.mxu0 %v287
    %313 = vmatprep.subr.bf16.mxu0 0
    %314 = vmatpush1.bf16.msra.mxu0 %v286
    %315 = vmatprep.subr.bf16.mxu0 0
    %316 = vmatpush1.bf16.msra.mxu0 %v285
    %317 = vmatprep.subr.bf16.mxu0 0
    %318 = vmatpush2.bf16.msra.mxu0 0
    %319 = vmatprep.subr.bf16.mxu0 0
    %320 = vmatpush2.bf16.msra.mxu0 0
    %321 = vmatprep.subr.bf16.mxu0 0
    %322 = vmatpush2.bf16.msra.mxu0 0
    %323 = vmatprep.subr.bf16.mxu0 0
    %324 = vmatpush2.bf16.msra.mxu0 0
    %325 = vmatprep.subr.bf16.mxu0 0
    %326 = vmatpush2.bf16.msra.mxu0 0
    %327 = vmatprep.subr.bf16.mxu0 0
    %328 = vmatpush2.bf16.msra.mxu0 0
    %329 = vmatprep.subr.bf16.mxu0 0
    %330 = vmatpush2.bf16.msra.mxu0 0
    %331 = vmatprep.subr.bf16.mxu0 0
    %332 = vmatpush2.bf16.msra.mxu0 0
    %333 = vmatprep.mubr.bf16.mxu0 0
    %334 = vmatmul.mubr.bf16.gmra.mxu0 %v229
    %v335 = vpop.f32.mrf.mxu0
    %v336 = vadd.f32 %v251, %v335
    %v337 = vpop.f32.mrf.mxu0
    %v338 = vpop.f32.mrf.mxu0
    %v339 = vadd.f32 %v251, %v338
    %v340 = vpop.f32.mrf.mxu0
    %341 = vdwg.mxu0
    %v342 = vmul.f32 %v336, 0.5
    %v343 = vmul.f32 %v339, 0.5
    %v344 = vtanh.pop %v342
    %v345 = vtanh.pop %v343
    %v346 = vmul.f32 %v344, 0.5
    %v347 = vmul.f32 %v345, 0.5
    %v348 = vadd.f32 %v346, 0.5
    %v349 = vadd.f32 %v347, 0.5
    %v350 = vpack.c.bf16 %v349, %v348
    %v351 = vld [vmem:[%s7] sm:$0xf]
    %v352 = vld [vmem:[%s7 + $0x4] sm:$0xf]
    %v353 = vld [vmem:[%s7 + $0x8] sm:$0xf]
    %v354 = vld [vmem:[%s7 + $0xc] sm:$0xf]
    %v355 = vld [vmem:[%s7 + $0x10] sm:$0xf]
    %v356 = vld [vmem:[%s7 + $0x14] sm:$0xf]
    %v357 = vld [vmem:[%s7 + $0x18] sm:$0xf]
    %v358 = vld [vmem:[%s7 + $0x1c] sm:$0xf]
    %v359 = vld [vmem:[%s7 + $0x20] sm:$0xf]
    %v360 = vld [vmem:[%s7 + $0x24] sm:$0xf]
    %v361 = vld [vmem:[%s7 + $0x28] sm:$0xf]
    %v362 = vld [vmem:[%s7 + $0x2c] sm:$0xf]
    %v363 = vld [vmem:[%s7 + $0x30] sm:$0xf]
    %v364 = vld [vmem:[%s7 + $0x34] sm:$0xf]
    %v365 = vld [vmem:[%s7 + $0x38] sm:$0xf]
    %v366 = vld [vmem:[%s7 + $0x3c] sm:$0xf]
    %v367 = vld [vmem:[%s8] sm:$0x1]
    %v369 = vlaneseq
    %v370 = vshrl.u32 %v369, 7
    %v371 = vsub.s32 0, %v370
    %v372 = vrot.slane %v367, %v371
    %v390 = vunpack.c.l.b16 %v351
    %v391 = vunpack.c.l.b16 %v352
    %v392 = vunpack.c.l.b16 %v353
    %v393 = vunpack.c.l.b16 %v354
    %v394 = vunpack.c.l.b16 %v355
    %v395 = vunpack.c.l.b16 %v356
    %v396 = vunpack.c.l.b16 %v357
    %v397 = vunpack.c.l.b16 %v358
    %v398 = vunpack.c.l.b16 %v359
    %v399 = vunpack.c.l.b16 %v360
    %v400 = vunpack.c.l.b16 %v361
    %v401 = vunpack.c.l.b16 %v362
    %v402 = vunpack.c.l.b16 %v363
    %v403 = vunpack.c.l.b16 %v364
    %v404 = vunpack.c.l.b16 %v365
    %v405 = vunpack.c.l.b16 %v366
    %v406 = vpack.c.b16 %v391, %v390
    %v407 = vpack.c.b16 %v393, %v392
    %v408 = vpack.c.b16 %v395, %v394
    %v409 = vpack.c.b16 %v397, %v396
    %v410 = vpack.c.b16 %v399, %v398
    %v411 = vpack.c.b16 %v401, %v400
    %v412 = vpack.c.b16 %v403, %v402
    %v413 = vpack.c.b16 %v405, %v404
    %422 = vmatprep.subr.bf16.mxu0 0
    %423 = vmatpush1.bf16.msra.mxu0 %v413
    %424 = vmatprep.subr.bf16.mxu0 0
    %425 = vmatpush1.bf16.msra.mxu0 %v412
    %426 = vmatprep.subr.bf16.mxu0 0
    %427 = vmatpush1.bf16.msra.mxu0 %v411
    %428 = vmatprep.subr.bf16.mxu0 0
    %429 = vmatpush1.bf16.msra.mxu0 %v410
    %430 = vmatprep.subr.bf16.mxu0 0
    %431 = vmatpush1.bf16.msra.mxu0 %v409
    %432 = vmatprep.subr.bf16.mxu0 0
    %433 = vmatpush1.bf16.msra.mxu0 %v408
    %434 = vmatprep.subr.bf16.mxu0 0
    %435 = vmatpush1.bf16.msra.mxu0 %v407
    %436 = vmatprep.subr.bf16.mxu0 0
    %437 = vmatpush1.bf16.msra.mxu0 %v406
    %438 = vmatprep.subr.bf16.mxu0 0
    %439 = vmatpush2.bf16.msra.mxu0 0
    %440 = vmatprep.subr.bf16.mxu0 0
    %441 = vmatpush2.bf16.msra.mxu0 0
    %442 = vmatprep.subr.bf16.mxu0 0
    %443 = vmatpush2.bf16.msra.mxu0 0
    %444 = vmatprep.subr.bf16.mxu0 0
    %445 = vmatpush2.bf16.msra.mxu0 0
    %446 = vmatprep.subr.bf16.mxu0 0
    %447 = vmatpush2.bf16.msra.mxu0 0
    %448 = vmatprep.subr.bf16.mxu0 0
    %449 = vmatpush2.bf16.msra.mxu0 0
    %450 = vmatprep.subr.bf16.mxu0 0
    %451 = vmatpush2.bf16.msra.mxu0 0
    %452 = vmatprep.subr.bf16.mxu0 0
    %453 = vmatpush2.bf16.msra.mxu0 0
    %454 = vmatprep.mubr.bf16.mxu0 0
    %455 = vmatmul.mubr.bf16.gmra.mxu0 %v350
    %v456 = vpop.f32.mrf.mxu0
    %v457 = vadd.f32 %v372, %v456
    %v458 = vpop.f32.mrf.mxu0
    %v459 = vpop.f32.mrf.mxu0
    %v460 = vadd.f32 %v372, %v459
    %v461 = vpop.f32.mrf.mxu0
    %462 = vdwg.mxu0
    %v463 = vmul.f32 %v457, 0.5
    %v464 = vmul.f32 %v460, 0.5
    %v465 = vtanh.pop %v463
    %v466 = vtanh.pop %v464
    %v467 = vmul.f32 %v465, 0.5
    %v468 = vmul.f32 %v466, 0.5
    %v469 = vadd.f32 %v467, 0.5
    %v470 = vadd.f32 %v468, 0.5
    %v471 = vpack.c.bf16 %v470, %v469
    %v472 = vld [vmem:[%s9] sm:$0xff]
    %v473 = vld [vmem:[%s9 + $0x8] sm:$0xf]
    %v474 = vld [vmem:[%s9 + $0xc] sm:$0xff]
    %v475 = vld [vmem:[%s9 + $0x14] sm:$0xf]
    %v476 = vld [vmem:[%s9 + $0x18] sm:$0xff]
    %v477 = vld [vmem:[%s9 + $0x20] sm:$0xf]
    %v478 = vld [vmem:[%s9 + $0x24] sm:$0xff]
    %v479 = vld [vmem:[%s9 + $0x2c] sm:$0xf]
    %v480 = vld [vmem:[%s9 + $0x30] sm:$0xff]
    %v481 = vld [vmem:[%s9 + $0x38] sm:$0xf]
    %v482 = vld [vmem:[%s9 + $0x3c] sm:$0xff]
    %v483 = vld [vmem:[%s9 + $0x44] sm:$0xf]
    %v484 = vld [vmem:[%s9 + $0x48] sm:$0xff]
    %v485 = vld [vmem:[%s9 + $0x50] sm:$0xf]
    %v486 = vld [vmem:[%s9 + $0x54] sm:$0xff]
    %v487 = vld [vmem:[%s9 + $0x5c] sm:$0xf]
    %v488 = vld [vmem:[%s9 + $0x60] sm:$0xff]
    %v489 = vld [vmem:[%s9 + $0x68] sm:$0xf]
    %v490 = vld [vmem:[%s9 + $0x6c] sm:$0xff]
    %v491 = vld [vmem:[%s9 + $0x74] sm:$0xf]
    %v492 = vld [vmem:[%s9 + $0x78] sm:$0xff]
    %v493 = vld [vmem:[%s9 + $0x80] sm:$0xf]
    %v494 = vld [vmem:[%s9 + $0x84] sm:$0xff]
    %v495 = vld [vmem:[%s9 + $0x8c] sm:$0xf]
    %v496 = vld [vmem:[%s9 + $0x90] sm:$0xff]
    %v497 = vld [vmem:[%s9 + $0x98] sm:$0xf]
    %v498 = vld [vmem:[%s9 + $0x9c] sm:$0xff]
    %v499 = vld [vmem:[%s9 + $0xa4] sm:$0xf]
    %v500 = vld [vmem:[%s9 + $0xa8] sm:$0xff]
    %v501 = vld [vmem:[%s9 + $0xb0] sm:$0xf]
    %v502 = vld [vmem:[%s9 + $0xb4] sm:$0xff]
    %v503 = vld [vmem:[%s9 + $0xbc] sm:$0xf]
    %v504 = vld [vmem:[%s10] sm:$0x7]
    %v506 = vlaneseq
    %v507 = vshrl.u32 %v506, 7
    %v508 = vsub.s32 0, %v507
    %v509 = vrot.slane %v504, %v508
    %v510 = vlaneseq
    %v511 = vshrl.u32 %v510, 7
    %v512 = vsub.s32 1, %v511
    %v513 = vrot.slane %v504, %v512
    %v514 = vlaneseq
    %v515 = vshrl.u32 %v514, 7
    %v516 = vsub.s32 2, %v515
    %v517 = vrot.slane %v504, %v516
    %v553 = vunpack.c.l.b16 %v472
    %v554 = vunpack.c.h.b16 %v472
    %v555 = vunpack.c.l.b16 %v473
    %v556 = vunpack.c.l.b16 %v474
    %v557 = vunpack.c.h.b16 %v474
    %v558 = vunpack.c.l.b16 %v475
    %v559 = vunpack.c.l.b16 %v476
    %v560 = vunpack.c.h.b16 %v476
    %v561 = vunpack.c.l.b16 %v477
    %v562 = vunpack.c.l.b16 %v478
    %v563 = vunpack.c.h.b16 %v478
    %v564 = vunpack.c.l.b16 %v479
    %v565 = vunpack.c.l.b16 %v480
    %v566 = vunpack.c.h.b16 %v480
    %v567 = vunpack.c.l.b16 %v481
    %v568 = vunpack.c.l.b16 %v482
    %v569 = vunpack.c.h.b16 %v482
    %v570 = vunpack.c.l.b16 %v483
    %v571 = vunpack.c.l.b16 %v484
    %v572 = vunpack.c.h.b16 %v484
    %v573 = vunpack.c.l.b16 %v485
    %v574 = vunpack.c.l.b16 %v486
    %v575 = vunpack.c.h.b16 %v486
    %v576 = vunpack.c.l.b16 %v487
    %v577 = vunpack.c.l.b16 %v488
    %v578 = vunpack.c.h.b16 %v488
    %v579 = vunpack.c.l.b16 %v489
    %v580 = vunpack.c.l.b16 %v490
    %v581 = vunpack.c.h.b16 %v490
    %v582 = vunpack.c.l.b16 %v491
    %v583 = vunpack.c.l.b16 %v492
    %v584 = vunpack.c.h.b16 %v492
    %v585 = vunpack.c.l.b16 %v493
    %v586 = vunpack.c.l.b16 %v494
    %v587 = vunpack.c.h.b16 %v494
    %v588 = vunpack.c.l.b16 %v495
    %v589 = vunpack.c.l.b16 %v496
    %v590 = vunpack.c.h.b16 %v496
    %v591 = vunpack.c.l.b16 %v497
    %v592 = vunpack.c.l.b16 %v498
    %v593 = vunpack.c.h.b16 %v498
    %v594 = vunpack.c.l.b16 %v499
    %v595 = vunpack.c.l.b16 %v500
    %v596 = vunpack.c.h.b16 %v500
    %v597 = vunpack.c.l.b16 %v501
    %v598 = vunpack.c.l.b16 %v502
    %v599 = vunpack.c.h.b16 %v502
    %v600 = vunpack.c.l.b16 %v503
    %v601 = vpack.c.b16 %v556, %v553
    %v602 = vpack.c.b16 %v557, %v554
    %v603 = vpack.c.b16 %v558, %v555
    %v604 = vpack.c.b16 %v562, %v559
    %v605 = vpack.c.b16 %v563, %v560
    %v606 = vpack.c.b16 %v564, %v561
    %v607 = vpack.c.b16 %v568, %v565
    %v608 = vpack.c.b16 %v569, %v566
    %v609 = vpack.c.b16 %v570, %v567
    %v610 = vpack.c.b16 %v574, %v571
    %v611 = vpack.c.b16 %v575, %v572
    %v612 = vpack.c.b16 %v576, %v573
    %v613 = vpack.c.b16 %v580, %v577
    %v614 = vpack.c.b16 %v581, %v578
    %v615 = vpack.c.b16 %v582, %v579
    %v616 = vpack.c.b16 %v586, %v583
    %v617 = vpack.c.b16 %v587, %v584
    %v618 = vpack.c.b16 %v588, %v585
    %v619 = vpack.c.b16 %v592, %v589
    %v620 = vpack.c.b16 %v593, %v590
    %v621 = vpack.c.b16 %v594, %v591
    %v622 = vpack.c.b16 %v598, %v595
    %v623 = vpack.c.b16 %v599, %v596
    %v624 = vpack.c.b16 %v600, %v597
    %649 = vmatprep.subr.bf16.mxu0 %v623
    %650 = vmatpush1.bf16.msra.mxu0 %v622
    %651 = vmatprep.subr.bf16.mxu0 %v620
    %652 = vmatpush1.bf16.msra.mxu0 %v619
    %653 = vmatprep.subr.bf16.mxu0 %v617
    %654 = vmatpush1.bf16.msra.mxu0 %v616
    %655 = vmatprep.subr.bf16.mxu0 %v614
    %656 = vmatpush1.bf16.msra.mxu0 %v613
    %657 = vmatprep.subr.bf16.mxu0 %v611
    %658 = vmatpush1.bf16.msra.mxu0 %v610
    %659 = vmatprep.subr.bf16.mxu0 %v608
    %660 = vmatpush1.bf16.msra.mxu0 %v607
    %661 = vmatprep.subr.bf16.mxu0 %v605
    %662 = vmatpush1.bf16.msra.mxu0 %v604
    %663 = vmatprep.subr.bf16.mxu0 %v602
    %664 = vmatpush1.bf16.msra.mxu0 %v601
    %665 = vmatprep.subr.bf16.mxu0 0
    %666 = vmatpush2.bf16.msra.mxu0 0
    %667 = vmatprep.subr.bf16.mxu0 0
    %668 = vmatpush2.bf16.msra.mxu0 0
    %669 = vmatprep.subr.bf16.mxu0 0
    %670 = vmatpush2.bf16.msra.mxu0 0
    %671 = vmatprep.subr.bf16.mxu0 0
    %672 = vmatpush2.bf16.msra.mxu0 0
    %673 = vmatprep.subr.bf16.mxu0 0
    %674 = vmatpush2.bf16.msra.mxu0 0
    %675 = vmatprep.subr.bf16.mxu0 0
    %676 = vmatpush2.bf16.msra.mxu0 0
    %677 = vmatprep.subr.bf16.mxu0 0
    %678 = vmatpush2.bf16.msra.mxu0 0
    %679 = vmatprep.subr.bf16.mxu0 0
    %680 = vmatpush2.bf16.msra.mxu0 0
    %681 = vmatprep.mubr.bf16.mxu0 0
    %682 = vmatmul.mubr.bf16.gmra.mxu0 %v471
    %v683 = vpop.f32.mrf.mxu0
    %v684 = vadd.f32 %v509, %v683
    %v685 = vpop.f32.mrf.mxu0
    %v686 = vadd.f32 %v513, %v685
    %v687 = vpop.f32.mrf.mxu0
    %v688 = vadd.f32 %v509, %v687
    %v689 = vpop.f32.mrf.mxu0
    %v690 = vadd.f32 %v513, %v689
    %691 = vdwg.mxu0
    %692 = vmatprep.subr.bf16.mxu0 0
    %693 = vmatpush1.bf16.msra.mxu0 %v624
    %694 = vmatprep.subr.bf16.mxu0 0
    %695 = vmatpush1.bf16.msra.mxu0 %v621
    %696 = vmatprep.subr.bf16.mxu0 0
    %697 = vmatpush1.bf16.msra.mxu0 %v618
    %698 = vmatprep.subr.bf16.mxu0 0
    %699 = vmatpush1.bf16.msra.mxu0 %v615
    %700 = vmatprep.subr.bf16.mxu0 0
    %701 = vmatpush1.bf16.msra.mxu0 %v612
    %702 = vmatprep.subr.bf16.mxu0 0
    %703 = vmatpush1.bf16.msra.mxu0 %v609
    %704 = vmatprep.subr.bf16.mxu0 0
    %705 = vmatpush1.bf16.msra.mxu0 %v606
    %706 = vmatprep.subr.bf16.mxu0 0
    %707 = vmatpush1.bf16.msra.mxu0 %v603
    %708 = vmatprep.subr.bf16.mxu0 0
    %709 = vmatpush2.bf16.msra.mxu0 0
    %710 = vmatprep.subr.bf16.mxu0 0
    %711 = vmatpush2.bf16.msra.mxu0 0
    %712 = vmatprep.subr.bf16.mxu0 0
    %713 = vmatpush2.bf16.msra.mxu0 0
    %714 = vmatprep.subr.bf16.mxu0 0
    %715 = vmatpush2.bf16.msra.mxu0 0
    %716 = vmatprep.subr.bf16.mxu0 0
    %717 = vmatpush2.bf16.msra.mxu0 0
    %718 = vmatprep.subr.bf16.mxu0 0
    %719 = vmatpush2.bf16.msra.mxu0 0
    %720 = vmatprep.subr.bf16.mxu0 0
    %721 = vmatpush2.bf16.msra.mxu0 0
    %722 = vmatprep.subr.bf16.mxu0 0
    %723 = vmatpush2.bf16.msra.mxu0 0
    %724 = vmatprep.mubr.bf16.mxu0 0
    %725 = vmatmul.mubr.bf16.gmra.mxu0 %v471
    %v726 = vpop.f32.mrf.mxu0
    %v727 = vadd.f32 %v517, %v726
    %v728 = vpop.f32.mrf.mxu0
    %v729 = vpop.f32.mrf.mxu0
    %v730 = vadd.f32 %v517, %v729
    %v731 = vpop.f32.mrf.mxu0
    %732 = vdwg.mxu0
    %733 = vst [vmem:[#allocation2] sm:$0xff] %v684
    %734 = vst [vmem:[#allocation2 + $0x8] sm:$0xff] %v686
    %vm735 = vcmask 359424
    %736 = vst.msk [vmem:[#allocation2 + $0x10] sm:$0xff] %vm735, %v727
    %737 = vst [vmem:[#allocation2 + $0x18] sm:$0xff] %v688
    %738 = vst [vmem:[#allocation2 + $0x20] sm:$0xff] %v690
    %739 = vst.msk [vmem:[#allocation2 + $0x28] sm:$0xff] %vm735, %v730
    // Predicated region
    $region46: #{nn_regressor_mises_lnv.1} parent=1 // pred_check
      _
    $region47: #{nn_regressor_mises_lnv.1} parent=1 // pred_check_branch
      %741 = sbr.rel (0) target = $region49
    $region48: #{nn_regressor_mises_lnv.1} parent=1 // pred_region
      %s743 = ssub.s32 768, 768
      %744 = vsyncadd [#allocation3], %s743
      %s745 = sshll.u32 [#allocation2], 4
      %s746 = int_to_ptr.vmem [resolvable:$true] %s745
      %751 = dma.vmem_to_hbm [thread:$0]  %s746, 768, %s11, [#allocation3], 384, 384, 24
    $region49: #{nn_regressor_mises_lnv.1} parent=1 // pred_fallthru
      _
    // Predicated region
    $region50: #{nn_regressor_mises_lnv.1} parent=1 // pred_check
      _
    $region51: #{nn_regressor_mises_lnv.1} parent=1 // pred_check_branch
      %753 = sbr.rel (0) target = $region53
    $region52: #{nn_regressor_mises_lnv.1} parent=1 // pred_region
      %754 = dma.done [#allocation3], 768
    $region53: #{nn_regressor_mises_lnv.1} parent=1 // pred_fallthru
      _
    %755 = vsyncpa [#allocation3], 1

</llo_original>
